<compile_context>
chip_gen: v7x
topology: tpu7x:2x2x1
jax: 0.10.0
libtpu: 0.0.40
codegen_flags: <defaults>
</compile_context>

<pallas_src>
import functools

import jax
import jax.numpy as jnp
from jax.experimental import pallas as pl
from jax.experimental.pallas import tpu as pltpu

_LANES = 128
# ~4 MiB of streamed input per grid step; Pallas double-buffers -> ~8 MiB,
# safely inside the 16 MiB default scoped VMEM on v5e (and 32 MiB v6e/v7x).
_TARGET_BYTES_PER_STEP = 4 << 20


def _pick_block_rows(n, bytes_per_row, target_bytes=_TARGET_BYTES_PER_STEP):
    """Samples per grid step: multiple of 8 (or == n), VMEM-budget sized."""
    b = int(target_bytes // max(1, bytes_per_row))
    if b < n:
        return n if n <= 8 else max(8, (b // 8) * 8)
    # Whole batch fits in one step; still split into >=2 steps when possible so
    # both TensorCores get work under dimension_semantics=("parallel",).
    if n >= 16:
        half = -(-n // 2)
        half = -(-half // 8) * 8
        if half < n:
            return half
    return n


# ------------------------------ kernels --------------------------------------
def _loss_kernel(p_ref, f_ref, idx_ref, o_ref, *, p_scale, f_scale, k_keep,
                 n_total, needs_mask):
    blk = p_ref.shape[0]            # samples in this block
    cf = f_ref.shape[1]             # feature channels

    # per-sample sum of p (reduce over lanes -> (B, 1))
    p_rows = jnp.sum(p_ref[...].astype(jnp.float32), axis=1, keepdims=True)

    # reduce-then-select: per-sample per-channel spatial sums -> (B, Cf)
    chan_sums = jnp.sum(f_ref[...].astype(jnp.float32), axis=-1)

    if needs_mask:  # static: only emitted when the last block is partial
        row_ids = pl.program_id(0) * blk + jax.lax.broadcasted_iota(
            jnp.int32, (blk, cf), 0)
        valid = row_ids < n_total
        chan_sums = jnp.where(valid, chan_sums, 0.0)
        p_rows = jnp.where(valid[:, :1], p_rows, 0.0)

    p_term = jnp.sum(p_rows) * p_scale

    # one-hot channel selection from the (distinct) top-k indices:
    # k_keep compares on the small (B, Cf) tile, not on the full feature map.
    chan_iota = jax.lax.broadcasted_iota(jnp.int32, (blk, cf), 1)
    idx = idx_ref[...]                                   # (B, k_keep) int32
    sel = chan_iota == idx[:, 0:1]
    for j in range(1, k_keep):
        sel = jnp.logical_or(sel, chan_iota == idx[:, j:j + 1])
    f_term = jnp.sum(jnp.where(sel, chan_sums, 0.0)) * f_scale

    o_ref[...] = jnp.full(o_ref.shape, p_term + f_term, dtype=jnp.float32)


def _p_only_kernel(p_ref, o_ref, *, p_scale, n_total, needs_mask):
    blk = p_ref.shape[0]
    rows = jnp.sum(p_ref[...].astype(jnp.float32), axis=1, keepdims=True)
    if needs_mask:
        row_ids = pl.program_id(0) * blk + jax.lax.broadcasted_iota(
            jnp.int32, (blk, 1), 0)
        rows = jnp.where(row_ids < n_total, rows, 0.0)
    o_ref[...] = jnp.full(o_ref.shape, jnp.sum(rows) * p_scale,
                          dtype=jnp.float32)


# ------------------------------- wrapper --------------------------------------
def aera_loss_beta(p, main_out, features, topk=25):
    N, Cp, Hp, Wp = p.shape
    Tp = Cp * Hp * Wp
    p_scale = 1.0 / float(N * Hp * Wp)

    p2 = p.reshape(N, Tp)                      # contiguous reshape, no pad/copy

    if topk == 0:
        bpr = Tp * p2.dtype.itemsize
        B = _pick_block_rows(N, bpr)
        G = -(-N // B)
        partials = pl.pallas_call(
            functools.partial(_p_only_kernel, p_scale=p_scale, n_total=N,
                              needs_mask=(N % B != 0)),
            out_shape=jax.ShapeDtypeStruct((G, 1, _LANES), jnp.float32),
            grid=(G,),
            in_specs=[pl.BlockSpec((B, Tp), lambda g: (g, 0))],
            out_specs=pl.BlockSpec((1, 1, _LANES), lambda g: (g, 0, 0)),
            compiler_params=pltpu.CompilerParams(
                dimension_semantics=("parallel",)),
        )(p2)
        return jnp.abs(jnp.sum(partials[:, 0, 0]))

    if topk <= 3:
        raise ValueError("topk must be 0 or > 3 (reference divides by topk - 3).")

    Cf = features.shape[1]
    S2 = features.shape[2] * features.shape[3]
    num_classes = main_out.shape[1]
    assert topk <= num_classes, "top_k k exceeds number of classes"
    assert num_classes <= Cf, "gather indices must be < features channel count"

    k_keep = topk - 3
    f_scale = 1.0 / float(N * Hp * Wp * k_keep)

    # softmax + top-k on the tiny (N, num_classes) logits stay in the wrapper
    # for exact parity with the reference.
    # TODO(synk): top-k sort has no clean Pallas primitive; done with lax.top_k.
    _, pred_idx = jax.lax.top_k(jax.nn.softmax(main_out, axis=-1), topk)
    pred_idx = pred_idx[:, 3:].astype(jnp.int32)          # (N, k_keep)

    f3 = features.reshape(N, Cf, S2)           # contiguous reshape, no pad/copy

    bpr = (Tp * p2.dtype.itemsize + Cf * S2 * f3.dtype.itemsize + k_keep * 4)
    B = _pick_block_rows(N, bpr)
    G = -(-N // B)

    kernel = functools.partial(_loss_kernel, p_scale=p_scale, f_scale=f_scale,
                               k_keep=k_keep, n_total=N,
                               needs_mask=(N % B != 0))

    partials = pl.pallas_call(
        kernel,
        out_shape=jax.ShapeDtypeStruct((G, 1, _LANES), jnp.float32),
        grid=(G,),
        in_specs=[
            # p[n] flattened: trailing dim = full extent (no (8,128) pad needed)
            pl.BlockSpec((B, Tp), lambda g: (g, 0)),
            # features[n] as (Cf, S2): trailing two dims = full extents
            pl.BlockSpec((B, Cf, S2), lambda g: (g, 0, 0)),
            # small int32 top-k index table, blocked with the batch
            pl.BlockSpec((B, k_keep), lambda g: (g, 0)),
        ],
        out_specs=pl.BlockSpec((1, 1, _LANES), lambda g: (g, 0, 0)),
        compiler_params=pltpu.CompilerParams(
            dimension_semantics=("parallel",)),
    )(p2, f3, pred_idx)

    # tiny epilogue: sum the per-step partials and take abs.
    return jnp.abs(jnp.sum(partials[:, 0, 0]))


# --------------------------- pure-JAX reference -------------------------------
def aera_loss_beta_ref(p, main_out, features, topk=25):
    loss = jnp.sum(p) / (p.shape[0] * p.shape[2] * p.shape[3])
    if topk != 0:
        sm = jax.nn.softmax(main_out, axis=-1)
        _, idx = jax.lax.top_k(sm, topk)
        idx = idx[:, 3:]
        N, _, S, _ = features.shape
        idx_full = jnp.broadcast_to(idx[:, :, None, None], (N, idx.shape[1], S, S))
        gathered = jnp.take_along_axis(features, idx_full, axis=1)
        loss = loss + jnp.sum(gathered) / (
            p.shape[0] * p.shape[2] * p.shape[3] * (topk - 3))
    return jnp.abs(loss)


if __name__ == "__main__":
    key = jax.random.PRNGKey(0)
    k1, k2, k3 = jax.random.split(key, 3)

    N, Cp, Hp, Wp = 2, 4, 16, 16
    num_classes = 32
    Cf, S = 32, 8
    topk = 25

    p = jax.random.normal(k1, (N, Cp, Hp, Wp), dtype=jnp.float32)
    main_out = jax.random.normal(k2, (N, num_classes), dtype=jnp.float32)
    features = jax.random.normal(k3, (N, Cf, S, S), dtype=jnp.float32)

    # main path (topk = 25)
    out = jax.block_until_ready(aera_loss_beta(p, main_out, features, topk=topk))
    ref = aera_loss_beta_ref(p, main_out, features, topk=topk)
    assert jnp.allclose(out, ref, rtol=1e-5, atol=1e-5), (out, ref)

    # topk == 0 path (p-sum only)
    out0 = jax.block_until_ready(aera_loss_beta(p, main_out, features, topk=0))
    ref0 = aera_loss_beta_ref(p, main_out, features, topk=0)
    assert jnp.allclose(out0, ref0, rtol=1e-5, atol=1e-5), (out0, ref0)

    print("KERNEL_OK")
</pallas_src>

<mosaic_0001>
module attributes {stable_mosaic.version = 11 : i64} {
  func.func @_loss_kernel(%arg0: i32, %arg1: memref<2x1024xf32, #tpu.memory_space<vmem>>, %arg2: memref<2x32x64xf32, #tpu.memory_space<vmem>>, %arg3: memref<2x22xi32, #tpu.memory_space<vmem>>, %arg4: memref<1x1x128xf32, #tpu.memory_space<vmem>>) attributes {dimension_semantics = [#tpu.dimension_semantics<parallel>], iteration_bounds = array<i64: 1>, scalar_prefetch = 0 : i64, scratch_operands = 0 : i64, tpu.core_type = #tpu.core_type<tc>, window_params = [{transform_indices = @transform_0, window_bounds = array<i64: 2, 1024>}, {transform_indices = @transform_1, window_bounds = array<i64: 2, 32, 64>}, {transform_indices = @transform_2, window_bounds = array<i64: 2, 22>}, {transform_indices = @transform_3, window_bounds = array<i64: 1, 1, 128>}]} {
    %c0 = arith.constant 0 : index
    %c0_0 = arith.constant 0 : index
    %0 = vector.load %arg1[%c0, %c0_0] : memref<2x1024xf32, #tpu.memory_space<vmem>>, vector<2x1024xf32>
    %cst = arith.constant dense<0.000000e+00> : vector<2xf32>
    %1 = vector.multi_reduction <add>, %0, %cst [1] : vector<2x1024xf32> to vector<2xf32>
    %2 = vector.shape_cast %1 : vector<2xf32> to vector<2x1xf32>
    %c0_1 = arith.constant 0 : index
    %c0_2 = arith.constant 0 : index
    %c0_3 = arith.constant 0 : index
    %3 = vector.load %arg2[%c0_1, %c0_2, %c0_3] : memref<2x32x64xf32, #tpu.memory_space<vmem>>, vector<2x32x64xf32>
    %cst_4 = arith.constant dense<0.000000e+00> : vector<2x32xf32>
    %4 = vector.multi_reduction <add>, %3, %cst_4 [2] : vector<2x32x64xf32> to vector<2x32xf32>
    %5 = vector.shape_cast %2 : vector<2x1xf32> to vector<1x2x1xf32>
    %cst_5 = arith.constant dense<0.000000e+00> : vector<1xf32>
    %6 = vector.multi_reduction <add>, %5, %cst_5 [1, 2] : vector<1x2x1xf32> to vector<1xf32>
    %7 = vector.shape_cast %6 : vector<1xf32> to vector<1x1x1xf32>
    %8 = vector.extract %7[0, 0, 0] : f32 from vector<1x1x1xf32>
    %cst_6 = arith.constant 0.001953125 : f32
    %9 = arith.mulf %8, %cst_6 : f32
    %10 = tpu.iota {dimensions = array<i32: 1>} : vector<2x32xi32>
    %c0_7 = arith.constant 0 : index
    %c0_8 = arith.constant 0 : index
    %11 = vector.load %arg3[%c0_7, %c0_8] : memref<2x22xi32, #tpu.memory_space<vmem>>, vector<2x22xi32>
    %12 = vector.extract_strided_slice %11 {offsets = [0, 0], sizes = [2, 1], strides = [1, 1]} : vector<2x22xi32> to vector<2x1xi32>
    %13 = vector.broadcast %12 : vector<2x1xi32> to vector<2x32xi32>
    %14 = arith.cmpi eq, %10, %13 : vector<2x32xi32>
    %15 = vector.extract_strided_slice %11 {offsets = [0, 1], sizes = [2, 1], strides = [1, 1]} : vector<2x22xi32> to vector<2x1xi32>
    %16 = vector.broadcast %15 : vector<2x1xi32> to vector<2x32xi32>
    %17 = arith.cmpi eq, %10, %16 : vector<2x32xi32>
    %18 = arith.ori %14, %17 : vector<2x32xi1>
    %19 = vector.extract_strided_slice %11 {offsets = [0, 2], sizes = [2, 1], strides = [1, 1]} : vector<2x22xi32> to vector<2x1xi32>
    %20 = vector.broadcast %19 : vector<2x1xi32> to vector<2x32xi32>
    %21 = arith.cmpi eq, %10, %20 : vector<2x32xi32>
    %22 = arith.ori %18, %21 : vector<2x32xi1>
    %23 = vector.extract_strided_slice %11 {offsets = [0, 3], sizes = [2, 1], strides = [1, 1]} : vector<2x22xi32> to vector<2x1xi32>
    %24 = vector.broadcast %23 : vector<2x1xi32> to vector<2x32xi32>
    %25 = arith.cmpi eq, %10, %24 : vector<2x32xi32>
    %26 = arith.ori %22, %25 : vector<2x32xi1>
    %27 = vector.extract_strided_slice %11 {offsets = [0, 4], sizes = [2, 1], strides = [1, 1]} : vector<2x22xi32> to vector<2x1xi32>
    %28 = vector.broadcast %27 : vector<2x1xi32> to vector<2x32xi32>
    %29 = arith.cmpi eq, %10, %28 : vector<2x32xi32>
    %30 = arith.ori %26, %29 : vector<2x32xi1>
    %31 = vector.extract_strided_slice %11 {offsets = [0, 5], sizes = [2, 1], strides = [1, 1]} : vector<2x22xi32> to vector<2x1xi32>
    %32 = vector.broadcast %31 : vector<2x1xi32> to vector<2x32xi32>
    %33 = arith.cmpi eq, %10, %32 : vector<2x32xi32>
    %34 = arith.ori %30, %33 : vector<2x32xi1>
    %35 = vector.extract_strided_slice %11 {offsets = [0, 6], sizes = [2, 1], strides = [1, 1]} : vector<2x22xi32> to vector<2x1xi32>
    %36 = vector.broadcast %35 : vector<2x1xi32> to vector<2x32xi32>
    %37 = arith.cmpi eq, %10, %36 : vector<2x32xi32>
    %38 = arith.ori %34, %37 : vector<2x32xi1>
    %39 = vector.extract_strided_slice %11 {offsets = [0, 7], sizes = [2, 1], strides = [1, 1]} : vector<2x22xi32> to vector<2x1xi32>
    %40 = vector.broadcast %39 : vector<2x1xi32> to vector<2x32xi32>
    %41 = arith.cmpi eq, %10, %40 : vector<2x32xi32>
    %42 = arith.ori %38, %41 : vector<2x32xi1>
    %43 = vector.extract_strided_slice %11 {offsets = [0, 8], sizes = [2, 1], strides = [1, 1]} : vector<2x22xi32> to vector<2x1xi32>
    %44 = vector.broadcast %43 : vector<2x1xi32> to vector<2x32xi32>
    %45 = arith.cmpi eq, %10, %44 : vector<2x32xi32>
    %46 = arith.ori %42, %45 : vector<2x32xi1>
    %47 = vector.extract_strided_slice %11 {offsets = [0, 9], sizes = [2, 1], strides = [1, 1]} : vector<2x22xi32> to vector<2x1xi32>
    %48 = vector.broadcast %47 : vector<2x1xi32> to vector<2x32xi32>
    %49 = arith.cmpi eq, %10, %48 : vector<2x32xi32>
    %50 = arith.ori %46, %49 : vector<2x32xi1>
    %51 = vector.extract_strided_slice %11 {offsets = [0, 10], sizes = [2, 1], strides = [1, 1]} : vector<2x22xi32> to vector<2x1xi32>
    %52 = vector.broadcast %51 : vector<2x1xi32> to vector<2x32xi32>
    %53 = arith.cmpi eq, %10, %52 : vector<2x32xi32>
    %54 = arith.ori %50, %53 : vector<2x32xi1>
    %55 = vector.extract_strided_slice %11 {offsets = [0, 11], sizes = [2, 1], strides = [1, 1]} : vector<2x22xi32> to vector<2x1xi32>
    %56 = vector.broadcast %55 : vector<2x1xi32> to vector<2x32xi32>
    %57 = arith.cmpi eq, %10, %56 : vector<2x32xi32>
    %58 = arith.ori %54, %57 : vector<2x32xi1>
    %59 = vector.extract_strided_slice %11 {offsets = [0, 12], sizes = [2, 1], strides = [1, 1]} : vector<2x22xi32> to vector<2x1xi32>
    %60 = vector.broadcast %59 : vector<2x1xi32> to vector<2x32xi32>
    %61 = arith.cmpi eq, %10, %60 : vector<2x32xi32>
    %62 = arith.ori %58, %61 : vector<2x32xi1>
    %63 = vector.extract_strided_slice %11 {offsets = [0, 13], sizes = [2, 1], strides = [1, 1]} : vector<2x22xi32> to vector<2x1xi32>
    %64 = vector.broadcast %63 : vector<2x1xi32> to vector<2x32xi32>
    %65 = arith.cmpi eq, %10, %64 : vector<2x32xi32>
    %66 = arith.ori %62, %65 : vector<2x32xi1>
    %67 = vector.extract_strided_slice %11 {offsets = [0, 14], sizes = [2, 1], strides = [1, 1]} : vector<2x22xi32> to vector<2x1xi32>
    %68 = vector.broadcast %67 : vector<2x1xi32> to vector<2x32xi32>
    %69 = arith.cmpi eq, %10, %68 : vector<2x32xi32>
    %70 = arith.ori %66, %69 : vector<2x32xi1>
    %71 = vector.extract_strided_slice %11 {offsets = [0, 15], sizes = [2, 1], strides = [1, 1]} : vector<2x22xi32> to vector<2x1xi32>
    %72 = vector.broadcast %71 : vector<2x1xi32> to vector<2x32xi32>
    %73 = arith.cmpi eq, %10, %72 : vector<2x32xi32>
    %74 = arith.ori %70, %73 : vector<2x32xi1>
    %75 = vector.extract_strided_slice %11 {offsets = [0, 16], sizes = [2, 1], strides = [1, 1]} : vector<2x22xi32> to vector<2x1xi32>
    %76 = vector.broadcast %75 : vector<2x1xi32> to vector<2x32xi32>
    %77 = arith.cmpi eq, %10, %76 : vector<2x32xi32>
    %78 = arith.ori %74, %77 : vector<2x32xi1>
    %79 = vector.extract_strided_slice %11 {offsets = [0, 17], sizes = [2, 1], strides = [1, 1]} : vector<2x22xi32> to vector<2x1xi32>
    %80 = vector.broadcast %79 : vector<2x1xi32> to vector<2x32xi32>
    %81 = arith.cmpi eq, %10, %80 : vector<2x32xi32>
    %82 = arith.ori %78, %81 : vector<2x32xi1>
    %83 = vector.extract_strided_slice %11 {offsets = [0, 18], sizes = [2, 1], strides = [1, 1]} : vector<2x22xi32> to vector<2x1xi32>
    %84 = vector.broadcast %83 : vector<2x1xi32> to vector<2x32xi32>
    %85 = arith.cmpi eq, %10, %84 : vector<2x32xi32>
    %86 = arith.ori %82, %85 : vector<2x32xi1>
    %87 = vector.extract_strided_slice %11 {offsets = [0, 19], sizes = [2, 1], strides = [1, 1]} : vector<2x22xi32> to vector<2x1xi32>
    %88 = vector.broadcast %87 : vector<2x1xi32> to vector<2x32xi32>
    %89 = arith.cmpi eq, %10, %88 : vector<2x32xi32>
    %90 = arith.ori %86, %89 : vector<2x32xi1>
    %91 = vector.extract_strided_slice %11 {offsets = [0, 20], sizes = [2, 1], strides = [1, 1]} : vector<2x22xi32> to vector<2x1xi32>
    %92 = vector.broadcast %91 : vector<2x1xi32> to vector<2x32xi32>
    %93 = arith.cmpi eq, %10, %92 : vector<2x32xi32>
    %94 = arith.ori %90, %93 : vector<2x32xi1>
    %95 = vector.extract_strided_slice %11 {offsets = [0, 21], sizes = [2, 1], strides = [1, 1]} : vector<2x22xi32> to vector<2x1xi32>
    %96 = vector.broadcast %95 : vector<2x1xi32> to vector<2x32xi32>
    %97 = arith.cmpi eq, %10, %96 : vector<2x32xi32>
    %98 = arith.ori %94, %97 : vector<2x32xi1>
    %cst_9 = arith.constant 0.000000e+00 : f32
    %99 = vector.broadcast %cst_9 : f32 to vector<2x32xf32>
    %100 = arith.select %98, %4, %99 : vector<2x32xi1>, vector<2x32xf32>
    %101 = vector.shape_cast %100 : vector<2x32xf32> to vector<1x2x32xf32>
    %cst_10 = arith.constant dense<0.000000e+00> : vector<1xf32>
    %102 = vector.multi_reduction <add>, %101, %cst_10 [1, 2] : vector<1x2x32xf32> to vector<1xf32>
    %103 = vector.shape_cast %102 : vector<1xf32> to vector<1x1x1xf32>
    %104 = vector.extract %103[0, 0, 0] : f32 from vector<1x1x1xf32>
    %cst_11 = arith.constant 8.87784117E-5 : f32
    %105 = arith.mulf %104, %cst_11 : f32
    %106 = arith.addf %9, %105 : f32
    %107 = vector.broadcast %106 : f32 to vector<1x1x128xf32>
    %c0_12 = arith.constant 0 : index
    %c0_13 = arith.constant 0 : index
    %c0_14 = arith.constant 0 : index
    %108 = vector.load %arg4[%c0_12, %c0_13, %c0_14] : memref<1x1x128xf32, #tpu.memory_space<vmem>>, vector<1x1x128xf32>
    tpu.vector_store %arg4[%c0_12, %c0_13, %c0_14], %107 {strides = array<i32>} : memref<1x1x128xf32, #tpu.memory_space<vmem>>, vector<1x1x128xf32>,
    return
  }
  func.func @transform_0(%arg0: i32) -> (i32, i32) {
    %c0_i32 = arith.constant 0 : i32
    %c0_i32_0 = arith.constant 0 : i32
    return %arg0, %c0_i32 : i32, i32
  }
  func.func @transform_1(%arg0: i32) -> (i32, i32, i32) {
    %c0_i32 = arith.constant 0 : i32
    %c0_i32_0 = arith.constant 0 : i32
    %c0_i32_1 = arith.constant 0 : i32
    return %arg0, %c0_i32, %c0_i32_0 : i32, i32, i32
  }
  func.func @transform_2(%arg0: i32) -> (i32, i32) {
    %c0_i32 = arith.constant 0 : i32
    %c0_i32_0 = arith.constant 0 : i32
    return %arg0, %c0_i32 : i32, i32
  }
  func.func @transform_3(%arg0: i32) -> (i32, i32, i32) {
    %c0_i32 = arith.constant 0 : i32
    %c0_i32_0 = arith.constant 0 : i32
    %c0_i32_1 = arith.constant 0 : i32
    return %arg0, %c0_i32, %c0_i32_0 : i32, i32, i32
  }
}

</mosaic_0001>

<llo_original>
// kernel: tpu_custom_call.1
$region0: #{tpu_custom_call.1}
  #allocation0 [shape = 'u32[]', space=smem, size = 0x4, offset = 0x4, fixed_abs, tag = 'smem constant byte address 0x4 - core index']
  #allocation1 [shape = 'u32[144,128]{1,0:T(1,128)}', space=vmem, size = 0x12000, scoped, tag = 'internal scratch']
  %s0 = inlined_call_operand.hbm [shape: f32[2,1024], index: 0, kind: input, shape index: {}]
  %s1 = inlined_call_operand.hbm [shape: f32[2,32,64], index: 1, kind: input, shape index: {}]
  %s2 = inlined_call_operand.vmem [shape: s32[2,22], index: 2, kind: input, shape index: {}]
  %s3 = inlined_call_operand.hbm [shape: f32[1,1,128], index: 3, kind: output, shape index: {}]
  %s4 = sld [smem:[#allocation0]]
  $region30: #{tpu_custom_call.1} parent=0
    _
  %s6 = ssub.s32 1, %s4
  %s7 = scalar_select 0, %s6, %s4
  $region1: #{tpu_custom_call.1} parent=0
    #allocation2 [shape = 'u8[8192]{0}', space=vmem, size = 0x2000, scoped, tag = 'input window, operand 0, single buffered']
    #allocation3 [shape = 's32[1]{0}', space=sflag, size = 0x4, scoped, tag = 'scoped memory for tpu_custom_call.1']
    #allocation4 [shape = 's32[1]{0}', space=sflag, size = 0x4, scoped, tag = 'scoped memory for tpu_custom_call.1']
    #allocation5 [shape = 'u8[32768]{0}', space=vmem, size = 0x8000, scoped, tag = 'input window, operand 1, single buffered']
    #allocation6 [shape = 's32[1]{0}', space=sflag, size = 0x4, scoped, tag = 'scoped memory for tpu_custom_call.1']
    #allocation7 [shape = 'u8[512]{0}', space=vmem, size = 0x400, scoped, tag = 'output window, operand 0, single buffered']
    %8 = vsyncpa [#allocation3], 0
    %9 = vsyncpa [#allocation6], 0
    %10 = vsyncpa [#allocation4], 0
    // Predicated region
    $region2: #{tpu_custom_call.1} parent=1 // pred_check
      _
    $region3: #{tpu_custom_call.1} parent=1 // pred_check_branch
      %12 = sbr.rel (0) target = $region5
    $region4: #{tpu_custom_call.1} parent=1 // pred_region
      %s14 = ssub.s32 256, 256
      %15 = vsyncadd [#allocation3], %s14
      %s17 = sshll.u32 [#allocation2], 4
      %s18 = int_to_ptr.vmem [resolvable:$true] %s17
      %20 = dma.hbm_to_vmem [thread:$0]  %s0, 256, %s18, [#allocation3]
    $region5: #{tpu_custom_call.1} parent=1 // pred_fallthru
      _
    // Predicated region
    $region6: #{tpu_custom_call.1} parent=1 // pred_check
      _
    $region7: #{tpu_custom_call.1} parent=1 // pred_check_branch
      %22 = sbr.rel (0) target = $region9
    $region8: #{tpu_custom_call.1} parent=1 // pred_region
      %s24 = ssub.s32 1024, 1024
      %25 = vsyncadd [#allocation6], %s24
      %s26 = sshll.u32 [#allocation5], 4
      %s27 = int_to_ptr.vmem [resolvable:$true] %s26
      %32 = dma.hbm_to_vmem [thread:$0]  %s1, 1024, %s27, [#allocation6], 128, 128, 8
    $region9: #{tpu_custom_call.1} parent=1 // pred_fallthru
      _
    // Predicated region
    $region10: #{tpu_custom_call.1} parent=1 // pred_check
      _
    $region11: #{tpu_custom_call.1} parent=1 // pred_check_branch
      %34 = sbr.rel (0) target = $region13
    $region12: #{tpu_custom_call.1} parent=1 // pred_region
      _
    $region13: #{tpu_custom_call.1} parent=1 // pred_fallthru
      _
    // Predicated region
    $region14: #{tpu_custom_call.1} parent=1 // pred_check
      _
    $region15: #{tpu_custom_call.1} parent=1 // pred_check_branch
      %36 = sbr.rel (0) target = $region17
    $region16: #{tpu_custom_call.1} parent=1 // pred_region
      %37 = dma.done [#allocation3], 256
    $region17: #{tpu_custom_call.1} parent=1 // pred_fallthru
      _
    // Predicated region
    $region18: #{tpu_custom_call.1} parent=1 // pred_check
      _
    $region19: #{tpu_custom_call.1} parent=1 // pred_check_branch
      %39 = sbr.rel (0) target = $region21
    $region20: #{tpu_custom_call.1} parent=1 // pred_region
      %40 = dma.done [#allocation6], 1024
    $region21: #{tpu_custom_call.1} parent=1 // pred_fallthru
      _
    %v41 = vld [vmem:[#allocation2] sm:$0xff]
    %v42 = vld [vmem:[#allocation2 + $0x8] sm:$0xff]
    %v45 = vcombine.high %v41, %v41
    %v47 = vunpack.c.l.s4 1983009808
    %v48 = vunpack.c.0.s8 %v47
    %v49 = vlaneseq
    %v50 = vshrl.u32 %v49, 7
    %v51 = vsub.s32 %v48, %v50
    %v52 = vrot.slane %v41, %v51
    %v54 = vunpack.c.l.s4 1983009808
    %v55 = vunpack.c.0.s8 %v54
    %v56 = vlaneseq
    %v57 = vshrl.u32 %v56, 7
    %v58 = vsub.s32 %v55, %v57
    %v59 = vrot.slane %v45, %v58
    %v60 = vcombine.high %v52, %v52
    %v61 = vcombine.high %v59, %v59
    %v62 = vcombine.high %v42, %v42
    %v64 = vunpack.c.l.s4 1983009808
    %v65 = vunpack.c.0.s8 %v64
    %v66 = vlaneseq
    %v67 = vshrl.u32 %v66, 7
    %v68 = vsub.s32 %v65, %v67
    %v69 = vrot.slane %v42, %v68
    %v71 = vunpack.c.l.s4 1983009808
    %v72 = vunpack.c.0.s8 %v71
    %v73 = vlaneseq
    %v74 = vshrl.u32 %v73, 7
    %v75 = vsub.s32 %v72, %v74
    %v76 = vrot.slane %v62, %v75
    %v77 = vcombine.high %v69, %v69
    %v78 = vcombine.high %v76, %v76
    %vm87 = vcmask 1041408
    %v88 = vsel %vm87, %v52, 0.0
    %v89 = vsel %vm87, %v60, 0.0
    %v90 = vadd.f32 %v88, %v89
    %v91 = vsel %vm87, %v59, 0.0
    %v92 = vadd.f32 %v90, %v91
    %v93 = vsel %vm87, %v61, 0.0
    %v94 = vadd.f32 %v92, %v93
    %v95 = vsel %vm87, %v69, 0.0
    %v96 = vadd.f32 %v94, %v95
    %v97 = vsel %vm87, %v77, 0.0
    %v98 = vadd.f32 %v96, %v97
    %v99 = vsel %vm87, %v76, 0.0
    %v100 = vadd.f32 %v98, %v99
    %v101 = vsel %vm87, %v78, 0.0
    %v102 = vadd.f32 %v100, %v101
    %103 = vadd.xlane.f32.xlu0 %v102
    %v104 = vpop.xlane.xlu0 %103
    %v105 = vld [vmem:[#allocation5] sm:$0xff]
    %v106 = vld [vmem:[#allocation5 + $0x8] sm:$0xff]
    %v107 = vld [vmem:[#allocation5 + $0x10] sm:$0xff]
    %v108 = vld [vmem:[#allocation5 + $0x18] sm:$0xff]
    %v109 = vld [vmem:[#allocation5 + $0x20] sm:$0xff]
    %v110 = vld [vmem:[#allocation5 + $0x28] sm:$0xff]
    %v111 = vld [vmem:[#allocation5 + $0x30] sm:$0xff]
    %v112 = vld [vmem:[#allocation5 + $0x38] sm:$0xff]
    %vm113 = vcmask 523264
    %v114 = vsel %vm113, %v105, 0.0
    %115 = vadd.xlane.f32.xlu0 %v114
    %v116 = vpop.xlane.xlu0 %115
    %v117 = vsel %vm113, %v106, 0.0
    %118 = vadd.xlane.f32.xlu0 %v117
    %v119 = vpop.xlane.xlu0 %118
    %v120 = vsel %vm113, %v107, 0.0
    %121 = vadd.xlane.f32.xlu0 %v120
    %v122 = vpop.xlane.xlu0 %121
    %v123 = vsel %vm113, %v108, 0.0
    %124 = vadd.xlane.f32.xlu0 %v123
    %v125 = vpop.xlane.xlu0 %124
    %v126 = vsel %vm113, %v109, 0.0
    %127 = vadd.xlane.f32.xlu0 %v126
    %v128 = vpop.xlane.xlu0 %127
    %v129 = vsel %vm113, %v110, 0.0
    %130 = vadd.xlane.f32.xlu0 %v129
    %v131 = vpop.xlane.xlu0 %130
    %v132 = vsel %vm113, %v111, 0.0
    %133 = vadd.xlane.f32.xlu0 %v132
    %v134 = vpop.xlane.xlu0 %133
    %v135 = vsel %vm113, %v112, 0.0
    %136 = vadd.xlane.f32.xlu0 %v135
    %v137 = vpop.xlane.xlu0 %136
    %vm138 = vcmask 1024
    %v139 = vsel %vm138, %v104, 0.0
    %140 = vadd.xlane.f32.xlu0 %v139
    %v141 = vpop.xlane.xlu0 %140
    %v142 = vrot.slane %v141, 4
    %v143 = vadd.f32 %v141, %v142
    %v144 = vrot.slane %v143, 2
    %v145 = vadd.f32 %v143, %v144
    %v146 = vrot.slane %v145, 1
    %v147 = vadd.f32 %v145, %v146
    %s148 = vtos %v147
    %s149 = smul.f32 %s148, 0.001953125
    %v150 = vlaneseq
    %v151 = vand.u32 %v150, 127
    %v152 = vld [vmem:[%s2] sm:$0x3]
    %153 = vset.pattern.permute.xlu0 0
    %154 = vperm.xlu0 %153, %v152
    %v155 = vpop.permute.xlu0 %154
    %vm156 = vcmp.eq.s32.totalorder %v151, %v155
    %157 = vset.pattern.permute.xlu0 1
    %158 = vperm.xlu0 %157, %v152
    %v159 = vpop.permute.xlu0 %158
    %vm160 = vcmp.eq.s32.totalorder %v151, %v159
    %vm161 = vmor %vm156, %vm160
    %162 = vset.pattern.permute.xlu0 2
    %163 = vperm.xlu0 %162, %v152
    %v164 = vpop.permute.xlu0 %163
    %vm165 = vcmp.eq.s32.totalorder %v151, %v164
    %vm166 = vmor %vm161, %vm165
    %167 = vset.pattern.permute.xlu0 3
    %168 = vperm.xlu0 %167, %v152
    %v169 = vpop.permute.xlu0 %168
    %vm170 = vcmp.eq.s32.totalorder %v151, %v169
    %vm171 = vmor %vm166, %vm170
    %172 = vset.pattern.permute.xlu0 4
    %173 = vperm.xlu0 %172, %v152
    %v174 = vpop.permute.xlu0 %173
    %vm175 = vcmp.eq.s32.totalorder %v151, %v174
    %vm176 = vmor %vm171, %vm175
    %177 = vset.pattern.permute.xlu0 5
    %178 = vperm.xlu0 %177, %v152
    %v179 = vpop.permute.xlu0 %178
    %vm180 = vcmp.eq.s32.totalorder %v151, %v179
    %vm181 = vmor %vm176, %vm180
    %182 = vset.pattern.permute.xlu0 6
    %183 = vperm.xlu0 %182, %v152
    %v184 = vpop.permute.xlu0 %183
    %vm185 = vcmp.eq.s32.totalorder %v151, %v184
    %vm186 = vmor %vm181, %vm185
    %187 = vset.pattern.permute.xlu0 7
    %188 = vperm.xlu0 %187, %v152
    %v189 = vpop.permute.xlu0 %188
    %vm190 = vcmp.eq.s32.totalorder %v151, %v189
    %vm191 = vmor %vm186, %vm190
    %192 = vset.pattern.permute.xlu0 8
    %193 = vperm.xlu0 %192, %v152
    %v194 = vpop.permute.xlu0 %193
    %vm195 = vcmp.eq.s32.totalorder %v151, %v194
    %vm196 = vmor %vm191, %vm195
    %197 = vset.pattern.permute.xlu0 9
    %198 = vperm.xlu0 %197, %v152
    %v199 = vpop.permute.xlu0 %198
    %vm200 = vcmp.eq.s32.totalorder %v151, %v199
    %vm201 = vmor %vm196, %vm200
    %202 = vset.pattern.permute.xlu0 10
    %203 = vperm.xlu0 %202, %v152
    %v204 = vpop.permute.xlu0 %203
    %vm205 = vcmp.eq.s32.totalorder %v151, %v204
    %vm206 = vmor %vm201, %vm205
    %207 = vset.pattern.permute.xlu0 11
    %208 = vperm.xlu0 %207, %v152
    %v209 = vpop.permute.xlu0 %208
    %vm210 = vcmp.eq.s32.totalorder %v151, %v209
    %vm211 = vmor %vm206, %vm210
    %212 = vset.pattern.permute.xlu0 12
    %213 = vperm.xlu0 %212, %v152
    %v214 = vpop.permute.xlu0 %213
    %vm215 = vcmp.eq.s32.totalorder %v151, %v214
    %vm216 = vmor %vm211, %vm215
    %217 = vset.pattern.permute.xlu0 13
    %218 = vperm.xlu0 %217, %v152
    %v219 = vpop.permute.xlu0 %218
    %vm220 = vcmp.eq.s32.totalorder %v151, %v219
    %vm221 = vmor %vm216, %vm220
    %222 = vset.pattern.permute.xlu0 14
    %223 = vperm.xlu0 %222, %v152
    %v224 = vpop.permute.xlu0 %223
    %vm225 = vcmp.eq.s32.totalorder %v151, %v224
    %vm226 = vmor %vm221, %vm225
    %227 = vset.pattern.permute.xlu0 15
    %228 = vperm.xlu0 %227, %v152
    %v229 = vpop.permute.xlu0 %228
    %vm230 = vcmp.eq.s32.totalorder %v151, %v229
    %vm231 = vmor %vm226, %vm230
    %232 = vset.pattern.permute.xlu0 16
    %233 = vperm.xlu0 %232, %v152
    %v234 = vpop.permute.xlu0 %233
    %vm235 = vcmp.eq.s32.totalorder %v151, %v234
    %vm236 = vmor %vm231, %vm235
    %237 = vset.pattern.permute.xlu0 17
    %238 = vperm.xlu0 %237, %v152
    %v239 = vpop.permute.xlu0 %238
    %vm240 = vcmp.eq.s32.totalorder %v151, %v239
    %vm241 = vmor %vm236, %vm240
    %242 = vset.pattern.permute.xlu0 18
    %243 = vperm.xlu0 %242, %v152
    %v244 = vpop.permute.xlu0 %243
    %vm245 = vcmp.eq.s32.totalorder %v151, %v244
    %vm246 = vmor %vm241, %vm245
    %247 = vset.pattern.permute.xlu0 19
    %248 = vperm.xlu0 %247, %v152
    %v249 = vpop.permute.xlu0 %248
    %vm250 = vcmp.eq.s32.totalorder %v151, %v249
    %vm251 = vmor %vm246, %vm250
    %252 = vset.pattern.permute.xlu0 20
    %253 = vperm.xlu0 %252, %v152
    %v254 = vpop.permute.xlu0 %253
    %vm255 = vcmp.eq.s32.totalorder %v151, %v254
    %vm256 = vmor %vm251, %vm255
    %257 = vset.pattern.permute.xlu0 21
    %258 = vperm.xlu0 %257, %v152
    %v259 = vpop.permute.xlu0 %258
    %vm260 = vcmp.eq.s32.totalorder %v151, %v259
    %vm261 = vmor %vm256, %vm260
    %v270 = vlaneseq
    %v271 = vshrl.u32 %v270, 7
    %v272 = vsub.s32 %v151, %v271
    %v273 = vrot.slane %v116, %v272
    %v274 = vadd.s32 %v151, 4294967288
    %v275 = vlaneseq
    %v276 = vshrl.u32 %v275, 7
    %v277 = vsub.s32 %v274, %v276
    %v278 = vrot.slane %v119, %v277
    %vm279 = vcmask 130112
    %v280 = vsel %vm279, %v278, %v273
    %v281 = vadd.s32 %v151, 4294967280
    %v282 = vlaneseq
    %v283 = vshrl.u32 %v282, 7
    %v284 = vsub.s32 %v281, %v283
    %v285 = vrot.slane %v122, %v284
    %vm286 = vcmask 195712
    %v287 = vsel %vm286, %v285, %v280
    %v288 = vadd.s32 %v151, 4294967272
    %v289 = vlaneseq
    %v290 = vshrl.u32 %v289, 7
    %v291 = vsub.s32 %v288, %v290
    %v292 = vrot.slane %v125, %v291
    %vm293 = vcmask 261312
    %v294 = vsel %vm293, %v292, %v287
    %v295 = vlaneseq
    %v296 = vshrl.u32 %v295, 7
    %v297 = vsub.s32 %v151, %v296
    %v298 = vrot.slane %v128, %v297
    %v299 = vlaneseq
    %v300 = vshrl.u32 %v299, 7
    %v301 = vsub.s32 %v274, %v300
    %v302 = vrot.slane %v131, %v301
    %v303 = vsel %vm279, %v302, %v298
    %v304 = vlaneseq
    %v305 = vshrl.u32 %v304, 7
    %v306 = vsub.s32 %v281, %v305
    %v307 = vrot.slane %v134, %v306
    %v308 = vsel %vm286, %v307, %v303
    %v309 = vlaneseq
    %v310 = vshrl.u32 %v309, 7
    %v311 = vsub.s32 %v288, %v310
    %v312 = vrot.slane %v137, %v311
    %v313 = vsel %vm293, %v312, %v308
    %vm314 = vcmask 1041409
    %v315 = vsel %vm314, %v313, %v294
    %v317 = vsel %vm261, %v315, 0.0
    %vm318 = vcmask 254976
    %v319 = vsel %vm318, %v317, 0.0
    %320 = vadd.xlane.f32.xlu0 %v319
    %v321 = vpop.xlane.xlu0 %320
    %v322 = vrot.slane %v321, 4
    %v323 = vadd.f32 %v321, %v322
    %v324 = vrot.slane %v323, 2
    %v325 = vadd.f32 %v323, %v324
    %v326 = vrot.slane %v325, 1
    %v327 = vadd.f32 %v325, %v326
    %s328 = vtos %v327
    %s329 = smul.f32 %s328, 8.877841e-05
    %s330 = sadd.f32 %s149, %s329
    %v331 = vstv %s330
    %332 = vst [vmem:[#allocation7] sm:$0x1] %v331
    // Predicated region
    $region22: #{tpu_custom_call.1} parent=1 // pred_check
      _
    $region23: #{tpu_custom_call.1} parent=1 // pred_check_branch
      %334 = sbr.rel (0) target = $region25
    $region24: #{tpu_custom_call.1} parent=1 // pred_region
      %s336 = ssub.s32 16, 16
      %337 = vsyncadd [#allocation4], %s336
      %s339 = sshll.u32 [#allocation7], 4
      %s340 = int_to_ptr.vmem [resolvable:$true] %s339
      %342 = dma.vmem_to_hbm [thread:$0]  %s340, 16, %s3, [#allocation4]
    $region25: #{tpu_custom_call.1} parent=1 // pred_fallthru
      _
    // Predicated region
    $region26: #{tpu_custom_call.1} parent=1 // pred_check
      _
    $region27: #{tpu_custom_call.1} parent=1 // pred_check_branch
      %344 = sbr.rel (0) target = $region29
    $region28: #{tpu_custom_call.1} parent=1 // pred_region
      %345 = dma.done [#allocation4], 16
    $region29: #{tpu_custom_call.1} parent=1 // pred_fallthru
      _
    %346 = vsyncpa [#allocation3], 1
    %347 = vsyncpa [#allocation6], 1
    %348 = vsyncpa [#allocation4], 1

</llo_original>
